<compile_context>
chip_gen: v7x
topology: tpu7x:2x2x1
jax: 0.10.0
libtpu: 0.0.40
codegen_flags: <defaults>
</compile_context>

<pallas_src>
import numpy as np
import jax
import jax.numpy as jnp
from jax.experimental import pallas as pl
from jax.experimental.pallas import tpu as pltpu

BN_EPS = 1e-5


# ----------------------------------------------------------------------------
# Fused kernel: avg-pool (one MXU matmul with a pooling matrix) + BatchNorm2d
# (training batch stats per channel) + Linear accumulation into logits.
#
#   x_ref:     [N, tile_c, HW]   f32   (lane axis = HW)
#   p_ref:     [HW, S]           f32   pooling matrix (1/A over each window)
#   gamma_ref: [tile_c, 1]       f32   BN scale for this channel block
#   beta_ref:  [tile_c, 1]       f32   BN shift for this channel block
#   w_ref:     [tile_c, S, TK]   bf16  classifier weights (K padded)
#   b_ref:     [1, TK]           f32   classifier bias (padded)
#   o_ref:     [N, TK]           f32   logits accumulator (resident over cb)
# ----------------------------------------------------------------------------
def fused_aux_head_kernel(x_ref, p_ref, gamma_ref, beta_ref, w_ref, b_ref, o_ref):
    cb = pl.program_id(1)                        # channel-block index (reduction)
    n, tile_c, hw = x_ref.shape
    s = p_ref.shape[1]

    @pl.when(cb == 0)
    def _init():
        # Initialize the resident logits block directly with the bias row.
        o_ref[...] = jnp.broadcast_to(b_ref[...], o_ref.shape)

    # ---- avg_pool2d for ALL channels of the block in ONE matmul -------------
    # Leading-dim merge only (lane dim HW unchanged).
    x2 = x_ref[...].reshape(n * tile_c, hw)                       # [N*tile_c, HW]
    pooled2 = jnp.dot(x2, p_ref[...],
                      preferred_element_type=jnp.float32)         # [N*tile_c, S]
    pooled = pooled2.reshape(n, tile_c, s)                        # [N, tile_c, S]

    # ---- BatchNorm2d training stats per channel (biased var) ---------------
    inv_cnt = 1.0 / float(n * s)
    red = jnp.sum(pooled, axis=2, keepdims=True)                  # [N, tile_c, 1]
    red_sq = jnp.sum(pooled * pooled, axis=2, keepdims=True)      # [N, tile_c, 1]
    ch_sum = jnp.sum(red, axis=0)                                 # [tile_c, 1]
    ch_sqsum = jnp.sum(red_sq, axis=0)                            # [tile_c, 1]
    mean = ch_sum * inv_cnt
    var = ch_sqsum * inv_cnt - mean * mean
    scale = jax.lax.rsqrt(var + BN_EPS) * gamma_ref[...]          # [tile_c, 1]
    shift = beta_ref[...] - mean * scale                          # [tile_c, 1]
    # Vectorized affine over the whole block (broadcast over N and S).
    y = pooled * scale + shift                                    # [N, tile_c, S]
    yb = y.astype(jnp.bfloat16)

    # ---- classifier: contract (channel, spatial) against the weights --------
    acc = jnp.zeros(o_ref.shape, jnp.float32)
    for j in range(tile_c):                                       # static unroll
        acc = acc + jnp.dot(yb[:, j, :], w_ref[j],
                            preferred_element_type=jnp.float32)   # [N, TK]
    o_ref[...] += acc


# ----------------------------------------------------------------------------
# Host-side helpers
# ----------------------------------------------------------------------------
def _pooling_matrix(H, W, avg):
    """P[h*W + w, hp*Wp + wp] = 1/(avg*avg) if (h, w) lies in window (hp, wp)."""
    Hp, Wp = H // avg, W // avg
    P = np.zeros((H * W, Hp * Wp), np.float32)
    inv_a = 1.0 / (avg * avg)
    for hp in range(Hp):
        for wp in range(Wp):
            col = hp * Wp + wp
            for dh in range(avg):
                for dw in range(avg):
                    P[(hp * avg + dh) * W + (wp * avg + dw), col] = inv_a
    return jnp.asarray(P)


def _vmem_limit_bytes():
    """Per-generation VMEM limit (v5e/v6e: 128 MiB, v7x: 64 MiB physical)."""
    cap = None
    try:
        cap = getattr(pltpu.get_tpu_info(), "vmem_capacity_bytes", None)
    except Exception:
        cap = None
    if not cap:
        cap = 64 * 1024 * 1024            # conservative (v7x-sized) fallback
    return int(min(cap * 3 // 4, 100 * 1024 * 1024))


def _pick_tile_c(C, *, S, N, HW, TK, budget):
    """Largest channel block with tile_c*S >= 128 that fits the VMEM budget.

    tile_c must divide C and be a multiple of 8 (sublane tiling) unless it
    covers all channels.
    """
    cands = [t for t in range(1, C + 1)
             if C % t == 0 and (t == C or t % 8 == 0)]

    def blk_bytes(t):
        x_blk = 2 * N * t * HW * 4        # f32 input block, double-buffered
        w_blk = 2 * t * S * TK * 2        # bf16 weights, double-buffered
        o_blk = 2 * N * TK * 4            # resident output block
        p_blk = 2 * HW * S * 4            # pooling matrix
        tmp = 6 * N * t * S * 4           # pooled / y / bf16 temporaries
        return x_blk + w_blk + o_blk + p_blk + tmp

    fitting = [t for t in cands if blk_bytes(t) <= budget]
    if not fitting:
        return min(cands)
    full_mxu = [t for t in fitting if t * S >= 128]
    return max(full_mxu) if full_mxu else max(fitting)


def auxillary_classifier_forward(x, gamma, beta, w_fc, b_fc, *, avg_size):
    """x: [N, C, H, W] float32 (NCHW). Returns [N, num_classes] float32."""
    N, C, H, W = x.shape
    Hp, Wp = H // avg_size, W // avg_size
    S = Hp * Wp
    HW = H * W
    K = w_fc.shape[1]

    K_pad = ((K + 127) // 128) * 128
    TK = min(K_pad, 1024)                 # wide, lane-dense logits tile
    nkt = K_pad // TK

    vmem_limit = _vmem_limit_bytes()
    tile_c = _pick_tile_c(C, S=S, N=N, HW=HW, TK=TK, budget=int(vmem_limit * 0.6))
    ncb = C // tile_c

    # Free (contiguous) reshapes only -- no extra HBM pass over x.
    x3 = x.reshape(N, C, HW)                                       # [N, C, HW]
    pool_mat = _pooling_matrix(H, W, avg_size)                     # [HW, S] f32
    gamma2 = gamma.reshape(C, 1).astype(jnp.float32)
    beta2 = beta.reshape(C, 1).astype(jnp.float32)
    # torch .view(N, -1) flatten order is f = c*S + s  ->  weights as [C, S, K].
    w3 = jnp.pad(w_fc.reshape(C, S, K),
                 ((0, 0), (0, 0), (0, K_pad - K))).astype(jnp.bfloat16)
    b_row = jnp.pad(b_fc, (0, K_pad - K)).reshape(1, K_pad).astype(jnp.float32)

    flops = nkt * 2 * N * C * HW * S + 2 * N * C * S * K_pad
    bytes_accessed = (4 * x3.size * nkt + 4 * pool_mat.size + 2 * w3.size
                      + 4 * b_row.size + 4 * 2 * C + 4 * N * K_pad)

    logits_pad = pl.pallas_call(
        fused_aux_head_kernel,
        out_shape=jax.ShapeDtypeStruct((N, K_pad), jnp.float32),
        grid=(nkt, ncb),                     # (class tiles, channel blocks)
        in_specs=[
            pl.BlockSpec((N, tile_c, HW), lambda kt, cb: (0, cb, 0)),    # x
            pl.BlockSpec((HW, S), lambda kt, cb: (0, 0)),                # pool mat
            pl.BlockSpec((tile_c, 1), lambda kt, cb: (cb, 0)),           # gamma
            pl.BlockSpec((tile_c, 1), lambda kt, cb: (cb, 0)),           # beta
            pl.BlockSpec((tile_c, S, TK), lambda kt, cb: (cb, 0, kt)),   # W (bf16)
            pl.BlockSpec((1, TK), lambda kt, cb: (0, kt)),               # bias
        ],
        out_specs=pl.BlockSpec((N, TK), lambda kt, cb: (0, kt)),
        compiler_params=pltpu.CompilerParams(
            dimension_semantics=("parallel", "arbitrary"),
            vmem_limit_bytes=vmem_limit,
        ),
        cost_estimate=pl.CostEstimate(
            flops=flops, transcendentals=nkt * C, bytes_accessed=bytes_accessed),
    )(x3, pool_mat, gamma2, beta2, w3, b_row)

    return logits_pad[:, :K]


# ----------------------------------------------------------------------------
# Pure-JAX reference (mirrors the PyTorch forward, training-mode BN).
# ----------------------------------------------------------------------------
def reference_forward(x, gamma, beta, w_fc, b_fc, *, avg_size):
    N, C, H, W = x.shape
    Hp, Wp = H // avg_size, W // avg_size
    pooled = x.reshape(N, C, Hp, avg_size, Wp, avg_size).mean(axis=(3, 5))
    mean = pooled.mean(axis=(0, 2, 3), keepdims=True)
    var = ((pooled - mean) ** 2).mean(axis=(0, 2, 3), keepdims=True)
    y = (pooled - mean) / jnp.sqrt(var + BN_EPS) * gamma.reshape(1, C, 1, 1) \
        + beta.reshape(1, C, 1, 1)
    flat = y.reshape(N, -1)
    return flat @ w_fc + b_fc


if __name__ == "__main__":
    # Small config consistent with the module defaults (n_lin=0, mlp_layers=0,
    # batchn=True): avg_size=4, input_features=4, in_size=16, num_classes=10.
    N, C, in_size, avg_size, num_classes = 2, 4, 16, 4, 10
    F = C * (in_size // avg_size) * (in_size // avg_size)

    key = jax.random.PRNGKey(0)
    kx, kw, kb, kg, kbe = jax.random.split(key, 5)

    x = jax.random.normal(kx, (N, C, in_size, in_size), dtype=jnp.float32)

    bound = 1.0 / np.sqrt(F)
    w_fc = jax.random.uniform(kw, (F, num_classes), jnp.float32, -bound, bound)
    b_fc = jax.random.uniform(kb, (num_classes,), jnp.float32, -bound, bound)
    gamma = 1.0 + 0.1 * jax.random.normal(kg, (C,), dtype=jnp.float32)
    beta = 0.1 * jax.random.normal(kbe, (C,), dtype=jnp.float32)

    out = auxillary_classifier_forward(
        x, gamma, beta, w_fc, b_fc, avg_size=avg_size
    )
    out = jax.block_until_ready(out)

    ref = reference_forward(x, gamma, beta, w_fc, b_fc, avg_size=avg_size)
    # Tolerance accounts for the bf16-operand classifier matmul (f32 accumulate);
    # pooling + BN statistics are computed in f32.
    np.testing.assert_allclose(np.asarray(out), np.asarray(ref),
                               rtol=1e-2, atol=1e-2)
    assert out.shape == (N, num_classes)
    print("KERNEL_OK")
</pallas_src>

<mosaic_0001>
module attributes {stable_mosaic.version = 11 : i64} {
  func.func @fused_aux_head_kernel(%arg0: i32, %arg1: i32, %arg2: memref<2x4x256xf32, #tpu.memory_space<vmem>>, %arg3: memref<256x16xf32, #tpu.memory_space<vmem>>, %arg4: memref<4x1xf32, #tpu.memory_space<vmem>>, %arg5: memref<4x1xf32, #tpu.memory_space<vmem>>, %arg6: memref<4x16x128xbf16, #tpu.memory_space<vmem>>, %arg7: memref<1x128xf32, #tpu.memory_space<vmem>>, %arg8: memref<2x128xf32, #tpu.memory_space<vmem>>) attributes {dimension_semantics = [#tpu.dimension_semantics<parallel>, #tpu.dimension_semantics<arbitrary>], iteration_bounds = array<i64: 1, 1>, scalar_prefetch = 0 : i64, scratch_operands = 0 : i64, tpu.core_type = #tpu.core_type<tc>, window_params = [{transform_indices = @transform_0, window_bounds = array<i64: 2, 4, 256>}, {pipeline_mode = #tpu.pipeline_mode<synchronous>, transform_indices = @transform_1, window_bounds = array<i64: 256, 16>}, {transform_indices = @transform_2, window_bounds = array<i64: 4, 1>}, {transform_indices = @transform_3, window_bounds = array<i64: 4, 1>}, {transform_indices = @transform_4, window_bounds = array<i64: 4, 16, 128>}, {transform_indices = @transform_5, window_bounds = array<i64: 1, 128>}, {transform_indices = @transform_6, window_bounds = array<i64: 2, 128>}]} {
    %c0_i32 = arith.constant 0 : i32
    %0 = arith.cmpi eq, %arg1, %c0_i32 : i32
    %1 = arith.extui %0 : i1 to i32
    %c0_i32_0 = arith.constant 0 : i32
    %2 = arith.cmpi ne, %1, %c0_i32_0 : i32
    scf.if %2 {
      %c0_34 = arith.constant 0 : index
      %c0_35 = arith.constant 0 : index
      %64 = vector.load %arg7[%c0_34, %c0_35] : memref<1x128xf32, #tpu.memory_space<vmem>>, vector<1x128xf32>
      %65 = vector.shape_cast %64 : vector<1x128xf32> to vector<1x128xf32>
      %66 = vector.broadcast %65 : vector<1x128xf32> to vector<2x128xf32>
      %c0_36 = arith.constant 0 : index
      %c0_37 = arith.constant 0 : index
      %67 = vector.load %arg8[%c0_36, %c0_37] : memref<2x128xf32, #tpu.memory_space<vmem>>, vector<2x128xf32>
      tpu.vector_store %arg8[%c0_36, %c0_37], %66 {strides = array<i32>} : memref<2x128xf32, #tpu.memory_space<vmem>>, vector<2x128xf32>,
    } else {
    }
    %c0 = arith.constant 0 : index
    %c0_1 = arith.constant 0 : index
    %c0_2 = arith.constant 0 : index
    %3 = vector.load %arg2[%c0, %c0_1, %c0_2] : memref<2x4x256xf32, #tpu.memory_space<vmem>>, vector<2x4x256xf32>
    %4 = vector.shape_cast %3 : vector<2x4x256xf32> to vector<8x256xf32>
    %c0_3 = arith.constant 0 : index
    %c0_4 = arith.constant 0 : index
    %5 = vector.load %arg3[%c0_3, %c0_4] : memref<256x16xf32, #tpu.memory_space<vmem>>, vector<256x16xf32>
    %cst = arith.constant dense<0.000000e+00> : vector<8x16xf32>
    %6 = tpu.matmul %4, %5, %cst {dimension_numbers = #tpu.dot_dimension_numbers<[1], [0], [0], [1], [0, 0, 1, 1], [], []>} : vector<8x256xf32>, vector<256x16xf32>, vector<8x16xf32> -> vector<8x16xf32>
    %7 = vector.shape_cast %6 : vector<8x16xf32> to vector<2x4x16xf32>
    %cst_5 = arith.constant dense<0.000000e+00> : vector<2x4xf32>
    %8 = vector.multi_reduction <add>, %7, %cst_5 [2] : vector<2x4x16xf32> to vector<2x4xf32>
    %9 = vector.shape_cast %8 : vector<2x4xf32> to vector<2x4x1xf32>
    %10 = arith.mulf %7, %7 : vector<2x4x16xf32>
    %cst_6 = arith.constant dense<0.000000e+00> : vector<2x4xf32>
    %11 = vector.multi_reduction <add>, %10, %cst_6 [2] : vector<2x4x16xf32> to vector<2x4xf32>
    %12 = vector.shape_cast %11 : vector<2x4xf32> to vector<2x4x1xf32>
    %cst_7 = arith.constant dense<0.000000e+00> : vector<4x1xf32>
    %13 = vector.multi_reduction <add>, %9, %cst_7 [0] : vector<2x4x1xf32> to vector<4x1xf32>
    %cst_8 = arith.constant dense<0.000000e+00> : vector<4x1xf32>
    %14 = vector.multi_reduction <add>, %12, %cst_8 [0] : vector<2x4x1xf32> to vector<4x1xf32>
    %cst_9 = arith.constant 3.125000e-02 : f32
    %15 = vector.broadcast %cst_9 : f32 to vector<4x1xf32>
    %16 = arith.mulf %13, %15 : vector<4x1xf32>
    %cst_10 = arith.constant 3.125000e-02 : f32
    %17 = vector.broadcast %cst_10 : f32 to vector<4x1xf32>
    %18 = arith.mulf %14, %17 : vector<4x1xf32>
    %19 = arith.mulf %16, %16 : vector<4x1xf32>
    %20 = arith.subf %18, %19 : vector<4x1xf32>
    %cst_11 = arith.constant 9.99999974E-6 : f32
    %21 = vector.broadcast %cst_11 : f32 to vector<4x1xf32>
    %22 = arith.addf %20, %21 : vector<4x1xf32>
    %23 = math.rsqrt %22 : vector<4x1xf32>
    %c0_12 = arith.constant 0 : index
    %c0_13 = arith.constant 0 : index
    %24 = vector.load %arg4[%c0_12, %c0_13] : memref<4x1xf32, #tpu.memory_space<vmem>>, vector<4x1xf32>
    %25 = arith.mulf %23, %24 : vector<4x1xf32>
    %c0_14 = arith.constant 0 : index
    %c0_15 = arith.constant 0 : index
    %26 = vector.load %arg5[%c0_14, %c0_15] : memref<4x1xf32, #tpu.memory_space<vmem>>, vector<4x1xf32>
    %27 = arith.mulf %16, %25 : vector<4x1xf32>
    %28 = arith.subf %26, %27 : vector<4x1xf32>
    %29 = vector.shape_cast %25 : vector<4x1xf32> to vector<1x4x1xf32>
    %30 = vector.broadcast %29 : vector<1x4x1xf32> to vector<2x4x16xf32>
    %31 = arith.mulf %7, %30 : vector<2x4x16xf32>
    %32 = vector.shape_cast %28 : vector<4x1xf32> to vector<1x4x1xf32>
    %33 = vector.broadcast %32 : vector<1x4x1xf32> to vector<2x4x16xf32>
    %34 = arith.addf %31, %33 : vector<2x4x16xf32>
    %35 = arith.truncf %34 : vector<2x4x16xf32> to vector<2x4x16xbf16>
    %cst_16 = arith.constant 0.000000e+00 : f32
    %36 = vector.broadcast %cst_16 : f32 to vector<2x128xf32>
    %37 = vector.extract_strided_slice %35 {offsets = [0, 0, 0], sizes = [2, 1, 16], strides = [1, 1, 1]} : vector<2x4x16xbf16> to vector<2x1x16xbf16>
    %38 = vector.shape_cast %37 : vector<2x1x16xbf16> to vector<2x16xbf16>
    %c0_17 = arith.constant 0 : index
    %c0_18 = arith.constant 0 : index
    %c0_19 = arith.constant 0 : index
    %39 = vector.load %arg6[%c0_17, %c0_18, %c0_19] : memref<4x16x128xbf16, #tpu.memory_space<vmem>>, vector<1x16x128xbf16>
    %40 = vector.shape_cast %39 : vector<1x16x128xbf16> to vector<16x128xbf16>
    %cst_20 = arith.constant dense<0.000000e+00> : vector<2x128xf32>
    %41 = tpu.matmul %38, %40, %cst_20 {dimension_numbers = #tpu.dot_dimension_numbers<[1], [0], [0], [1], [0, 0, 1, 1], [], []>} : vector<2x16xbf16>, vector<16x128xbf16>, vector<2x128xf32> -> vector<2x128xf32>
    %42 = arith.addf %36, %41 : vector<2x128xf32>
    %43 = vector.extract_strided_slice %35 {offsets = [0, 1, 0], sizes = [2, 1, 16], strides = [1, 1, 1]} : vector<2x4x16xbf16> to vector<2x1x16xbf16>
    %44 = vector.shape_cast %43 : vector<2x1x16xbf16> to vector<2x16xbf16>
    %c1 = arith.constant 1 : index
    %c0_21 = arith.constant 0 : index
    %c0_22 = arith.constant 0 : index
    %45 = vector.load %arg6[%c1, %c0_21, %c0_22] : memref<4x16x128xbf16, #tpu.memory_space<vmem>>, vector<1x16x128xbf16>
    %46 = vector.shape_cast %45 : vector<1x16x128xbf16> to vector<16x128xbf16>
    %cst_23 = arith.constant dense<0.000000e+00> : vector<2x128xf32>
    %47 = tpu.matmul %44, %46, %cst_23 {dimension_numbers = #tpu.dot_dimension_numbers<[1], [0], [0], [1], [0, 0, 1, 1], [], []>} : vector<2x16xbf16>, vector<16x128xbf16>, vector<2x128xf32> -> vector<2x128xf32>
    %48 = arith.addf %42, %47 : vector<2x128xf32>
    %49 = vector.extract_strided_slice %35 {offsets = [0, 2, 0], sizes = [2, 1, 16], strides = [1, 1, 1]} : vector<2x4x16xbf16> to vector<2x1x16xbf16>
    %50 = vector.shape_cast %49 : vector<2x1x16xbf16> to vector<2x16xbf16>
    %c2 = arith.constant 2 : index
    %c0_24 = arith.constant 0 : index
    %c0_25 = arith.constant 0 : index
    %51 = vector.load %arg6[%c2, %c0_24, %c0_25] : memref<4x16x128xbf16, #tpu.memory_space<vmem>>, vector<1x16x128xbf16>
    %52 = vector.shape_cast %51 : vector<1x16x128xbf16> to vector<16x128xbf16>
    %cst_26 = arith.constant dense<0.000000e+00> : vector<2x128xf32>
    %53 = tpu.matmul %50, %52, %cst_26 {dimension_numbers = #tpu.dot_dimension_numbers<[1], [0], [0], [1], [0, 0, 1, 1], [], []>} : vector<2x16xbf16>, vector<16x128xbf16>, vector<2x128xf32> -> vector<2x128xf32>
    %54 = arith.addf %48, %53 : vector<2x128xf32>
    %55 = vector.extract_strided_slice %35 {offsets = [0, 3, 0], sizes = [2, 1, 16], strides = [1, 1, 1]} : vector<2x4x16xbf16> to vector<2x1x16xbf16>
    %56 = vector.shape_cast %55 : vector<2x1x16xbf16> to vector<2x16xbf16>
    %c3 = arith.constant 3 : index
    %c0_27 = arith.constant 0 : index
    %c0_28 = arith.constant 0 : index
    %57 = vector.load %arg6[%c3, %c0_27, %c0_28] : memref<4x16x128xbf16, #tpu.memory_space<vmem>>, vector<1x16x128xbf16>
    %58 = vector.shape_cast %57 : vector<1x16x128xbf16> to vector<16x128xbf16>
    %cst_29 = arith.constant dense<0.000000e+00> : vector<2x128xf32>
    %59 = tpu.matmul %56, %58, %cst_29 {dimension_numbers = #tpu.dot_dimension_numbers<[1], [0], [0], [1], [0, 0, 1, 1], [], []>} : vector<2x16xbf16>, vector<16x128xbf16>, vector<2x128xf32> -> vector<2x128xf32>
    %60 = arith.addf %54, %59 : vector<2x128xf32>
    %c0_30 = arith.constant 0 : index
    %c0_31 = arith.constant 0 : index
    %61 = vector.load %arg8[%c0_30, %c0_31] : memref<2x128xf32, #tpu.memory_space<vmem>>, vector<2x128xf32>
    %62 = arith.addf %61, %60 : vector<2x128xf32>
    %c0_32 = arith.constant 0 : index
    %c0_33 = arith.constant 0 : index
    %63 = vector.load %arg8[%c0_32, %c0_33] : memref<2x128xf32, #tpu.memory_space<vmem>>, vector<2x128xf32>
    tpu.vector_store %arg8[%c0_32, %c0_33], %62 {strides = array<i32>} : memref<2x128xf32, #tpu.memory_space<vmem>>, vector<2x128xf32>,
    return
  }
  func.func @transform_0(%arg0: i32, %arg1: i32) -> (i32, i32, i32) {
    %c0_i32 = arith.constant 0 : i32
    %c0_i32_0 = arith.constant 0 : i32
    %c0_i32_1 = arith.constant 0 : i32
    return %c0_i32, %arg1, %c0_i32_0 : i32, i32, i32
  }
  func.func @transform_1(%arg0: i32, %arg1: i32) -> (i32, i32) {
    %c0_i32 = arith.constant 0 : i32
    %c0_i32_0 = arith.constant 0 : i32
    %c0_i32_1 = arith.constant 0 : i32
    return %c0_i32, %c0_i32_0 : i32, i32
  }
  func.func @transform_2(%arg0: i32, %arg1: i32) -> (i32, i32) {
    %c0_i32 = arith.constant 0 : i32
    %c0_i32_0 = arith.constant 0 : i32
    return %arg1, %c0_i32 : i32, i32
  }
  func.func @transform_3(%arg0: i32, %arg1: i32) -> (i32, i32) {
    %c0_i32 = arith.constant 0 : i32
    %c0_i32_0 = arith.constant 0 : i32
    return %arg1, %c0_i32 : i32, i32
  }
  func.func @transform_4(%arg0: i32, %arg1: i32) -> (i32, i32, i32) {
    %c0_i32 = arith.constant 0 : i32
    %c0_i32_0 = arith.constant 0 : i32
    return %arg1, %c0_i32, %arg0 : i32, i32, i32
  }
  func.func @transform_5(%arg0: i32, %arg1: i32) -> (i32, i32) {
    %c0_i32 = arith.constant 0 : i32
    %c0_i32_0 = arith.constant 0 : i32
    return %c0_i32, %arg0 : i32, i32
  }
  func.func @transform_6(%arg0: i32, %arg1: i32) -> (i32, i32) {
    %c0_i32 = arith.constant 0 : i32
    %c0_i32_0 = arith.constant 0 : i32
    return %c0_i32, %arg0 : i32, i32
  }
}

</mosaic_0001>

<llo_original>
// kernel: tpu_custom_call.1
$region0: #{tpu_custom_call.1}
  #allocation0 [shape = 'u32[]', space=smem, size = 0x4, offset = 0x4, fixed_abs, tag = 'smem constant byte address 0x4 - core index']
  #allocation1 [shape = 'u32[144,128]{1,0:T(1,128)}', space=vmem, size = 0x12000, scoped, tag = 'internal scratch']
  %s0 = inlined_call_operand.vmem [shape: f32[2,4,256], index: 0, kind: input, shape index: {}]
  %s1 = inlined_call_operand.vmem [shape: f32[256,16], index: 1, kind: input, shape index: {}]
  %s2 = inlined_call_operand.vmem [shape: f32[4,1], index: 2, kind: input, shape index: {}]
  %s3 = inlined_call_operand.vmem [shape: f32[4,1], index: 3, kind: input, shape index: {}]
  %s4 = inlined_call_operand.vmem [shape: bf16[4,16,128], index: 4, kind: input, shape index: {}]
  %s5 = inlined_call_operand.vmem [shape: f32[1,128], index: 5, kind: input, shape index: {}]
  %s6 = inlined_call_operand.hbm [shape: f32[2,128], index: 6, kind: output, shape index: {}]
  %s7 = sld [smem:[#allocation0]]
  $region38: #{tpu_custom_call.1} parent=0
    _
  %s9 = ssub.s32 1, %s7
  %s10 = scalar_select 0, %s9, %s7
  $region1: #{tpu_custom_call.1} parent=0
    #allocation2 [shape = 'u8[1024]{0}', space=vmem, size = 0x400, scoped, tag = 'output window, operand 0, single buffered']
    #allocation3 [shape = 's32[1]{0}', space=sflag, size = 0x4, scoped, tag = 'scoped memory for tpu_custom_call.1']
    %11 = vsyncpa [#allocation3], 0
    // Predicated region
    $region2: #{tpu_custom_call.1} parent=1 // pred_check
      _
    $region3: #{tpu_custom_call.1} parent=1 // pred_check_branch
      %13 = sbr.rel (0) target = $region5
    $region4: #{tpu_custom_call.1} parent=1 // pred_region
      _
    $region5: #{tpu_custom_call.1} parent=1 // pred_fallthru
      _
    // Predicated region
    $region6: #{tpu_custom_call.1} parent=1 // pred_check
      _
    $region7: #{tpu_custom_call.1} parent=1 // pred_check_branch
      %15 = sbr.rel (0) target = $region9
    $region8: #{tpu_custom_call.1} parent=1 // pred_region
      _
    $region9: #{tpu_custom_call.1} parent=1 // pred_fallthru
      _
    // Predicated region
    $region10: #{tpu_custom_call.1} parent=1 // pred_check
      _
    $region11: #{tpu_custom_call.1} parent=1 // pred_check_branch
      %17 = sbr.rel (0) target = $region13
    $region12: #{tpu_custom_call.1} parent=1 // pred_region
      _
    $region13: #{tpu_custom_call.1} parent=1 // pred_fallthru
      _
    // Predicated region
    $region14: #{tpu_custom_call.1} parent=1 // pred_check
      _
    $region15: #{tpu_custom_call.1} parent=1 // pred_check_branch
      %19 = sbr.rel (0) target = $region17
    $region16: #{tpu_custom_call.1} parent=1 // pred_region
      _
    $region17: #{tpu_custom_call.1} parent=1 // pred_fallthru
      _
    // Predicated region
    $region18: #{tpu_custom_call.1} parent=1 // pred_check
      _
    $region19: #{tpu_custom_call.1} parent=1 // pred_check_branch
      %21 = sbr.rel (0) target = $region21
    $region20: #{tpu_custom_call.1} parent=1 // pred_region
      _
    $region21: #{tpu_custom_call.1} parent=1 // pred_fallthru
      _
    // Predicated region
    $region22: #{tpu_custom_call.1} parent=1 // pred_check
      _
    $region23: #{tpu_custom_call.1} parent=1 // pred_check_branch
      %23 = sbr.rel (0) target = $region25
    $region24: #{tpu_custom_call.1} parent=1 // pred_region
      _
    $region25: #{tpu_custom_call.1} parent=1 // pred_fallthru
      _
    %p25 = scmp.eq.s32.totalorder 0, 0
    // Predicated region
    $region26: #{tpu_custom_call.1} parent=1 // pred_check
      %p26 = pneg %p25
    $region27: #{tpu_custom_call.1} parent=1 // pred_check_branch
      %28 = sbr.rel (%p26) target = $region29
    $region28: #{tpu_custom_call.1} parent=1 // pred_region
      %v29 = vld [vmem:[%s5] sm:$0x1]
      %v31 = vlaneseq
      %v32 = vshrl.u32 %v31, 7
      %v33 = vsub.s32 0, %v32
      %v34 = vrot.slane %v29, %v33
      %36 = vst [vmem:[#allocation2] sm:$0x3] %v34
    $region29: #{tpu_custom_call.1} parent=1 // pred_fallthru
      _
    %v37 = vld [vmem:[%s0] sm:$0xff]
    %v38 = vld [vmem:[%s0 + $0x8] sm:$0xff]
    %v39 = vld [vmem:[%s1] sm:$0xff]
    %v40 = vld [vmem:[%s1 + $0x8] sm:$0xff]
    %v41 = vld [vmem:[%s1 + $0x10] sm:$0xff]
    %v42 = vld [vmem:[%s1 + $0x18] sm:$0xff]
    %v43 = vld [vmem:[%s1 + $0x20] sm:$0xff]
    %v44 = vld [vmem:[%s1 + $0x28] sm:$0xff]
    %v45 = vld [vmem:[%s1 + $0x30] sm:$0xff]
    %v46 = vld [vmem:[%s1 + $0x38] sm:$0xff]
    %v47 = vld [vmem:[%s1 + $0x40] sm:$0xff]
    %v48 = vld [vmem:[%s1 + $0x48] sm:$0xff]
    %v49 = vld [vmem:[%s1 + $0x50] sm:$0xff]
    %v50 = vld [vmem:[%s1 + $0x58] sm:$0xff]
    %v51 = vld [vmem:[%s1 + $0x60] sm:$0xff]
    %v52 = vld [vmem:[%s1 + $0x68] sm:$0xff]
    %v53 = vld [vmem:[%s1 + $0x70] sm:$0xff]
    %v54 = vld [vmem:[%s1 + $0x78] sm:$0xff]
    %v55 = vld [vmem:[%s1 + $0x80] sm:$0xff]
    %v56 = vld [vmem:[%s1 + $0x88] sm:$0xff]
    %v57 = vld [vmem:[%s1 + $0x90] sm:$0xff]
    %v58 = vld [vmem:[%s1 + $0x98] sm:$0xff]
    %v59 = vld [vmem:[%s1 + $0xa0] sm:$0xff]
    %v60 = vld [vmem:[%s1 + $0xa8] sm:$0xff]
    %v61 = vld [vmem:[%s1 + $0xb0] sm:$0xff]
    %v62 = vld [vmem:[%s1 + $0xb8] sm:$0xff]
    %v63 = vld [vmem:[%s1 + $0xc0] sm:$0xff]
    %v64 = vld [vmem:[%s1 + $0xc8] sm:$0xff]
    %v65 = vld [vmem:[%s1 + $0xd0] sm:$0xff]
    %v66 = vld [vmem:[%s1 + $0xd8] sm:$0xff]
    %v67 = vld [vmem:[%s1 + $0xe0] sm:$0xff]
    %v68 = vld [vmem:[%s1 + $0xe8] sm:$0xff]
    %v69 = vld [vmem:[%s1 + $0xf0] sm:$0xff]
    %v70 = vld [vmem:[%s1 + $0xf8] sm:$0xff]
    %v73 = vcombine.low %v37, %v38
    %v74 = vcombine.high %v37, %v38
    %77 = vmatprep.subr.mxu0 0.0
    %78 = vmatpush1.msra.mxu0 %v39
    %79 = vmatprep.subr.mxu0 0.0
    %80 = vmatpush1.msra.mxu0 %v40
    %81 = vmatprep.subr.mxu0 0.0
    %82 = vmatpush1.msra.mxu0 %v41
    %83 = vmatprep.subr.mxu0 0.0
    %84 = vmatpush1.msra.mxu0 %v42
    %85 = vmatprep.subr.mxu0 0.0
    %86 = vmatpush1.msra.mxu0 %v43
    %87 = vmatprep.subr.mxu0 0.0
    %88 = vmatpush1.msra.mxu0 %v44
    %89 = vmatprep.subr.mxu0 0.0
    %90 = vmatpush1.msra.mxu0 %v45
    %91 = vmatprep.subr.mxu0 0.0
    %92 = vmatpush1.msra.mxu0 %v46
    %93 = vmatprep.subr.mxu0 0.0
    %94 = vmatpush1.msra.mxu0 %v47
    %95 = vmatprep.subr.mxu0 0.0
    %96 = vmatpush1.msra.mxu0 %v48
    %97 = vmatprep.subr.mxu0 0.0
    %98 = vmatpush1.msra.mxu0 %v49
    %99 = vmatprep.subr.mxu0 0.0
    %100 = vmatpush1.msra.mxu0 %v50
    %101 = vmatprep.subr.mxu0 0.0
    %102 = vmatpush1.msra.mxu0 %v51
    %103 = vmatprep.subr.mxu0 0.0
    %104 = vmatpush1.msra.mxu0 %v52
    %105 = vmatprep.subr.mxu0 0.0
    %106 = vmatpush1.msra.mxu0 %v53
    %107 = vmatprep.subr.mxu0 0.0
    %108 = vmatpush1.msra.mxu0 %v54
    %109 = vmatprep.subr.mxu0 0.0
    %110 = vmatpush1.msra.mxu0 %v55
    %111 = vmatprep.subr.mxu0 0.0
    %112 = vmatpush1.msra.mxu0 %v56
    %113 = vmatprep.subr.mxu0 0.0
    %114 = vmatpush1.msra.mxu0 %v57
    %115 = vmatprep.subr.mxu0 0.0
    %116 = vmatpush1.msra.mxu0 %v58
    %117 = vmatprep.subr.mxu0 0.0
    %118 = vmatpush1.msra.mxu0 %v59
    %119 = vmatprep.subr.mxu0 0.0
    %120 = vmatpush1.msra.mxu0 %v60
    %121 = vmatprep.subr.mxu0 0.0
    %122 = vmatpush1.msra.mxu0 %v61
    %123 = vmatprep.subr.mxu0 0.0
    %124 = vmatpush1.msra.mxu0 %v62
    %125 = vmatprep.subr.mxu0 0.0
    %126 = vmatpush1.msra.mxu0 %v63
    %127 = vmatprep.subr.mxu0 0.0
    %128 = vmatpush1.msra.mxu0 %v64
    %129 = vmatprep.subr.mxu0 0.0
    %130 = vmatpush1.msra.mxu0 %v65
    %131 = vmatprep.subr.mxu0 0.0
    %132 = vmatpush1.msra.mxu0 %v66
    %133 = vmatprep.subr.mxu0 0.0
    %134 = vmatpush1.msra.mxu0 %v67
    %135 = vmatprep.subr.mxu0 0.0
    %136 = vmatpush1.msra.mxu0 %v68
    %137 = vmatprep.subr.mxu0 0.0
    %138 = vmatpush1.msra.mxu0 %v69
    %139 = vmatprep.subr.mxu0 0.0
    %140 = vmatpush1.msra.mxu0 %v70
    %141 = vmatprep.mubr.f32.mxu0 %v74
    %142 = vmatmul.mubr.f32.gmra.mrb[0].mxu0 %v73
    %v143 = vpop.f32.mrb[0].mxu0
    %v144 = vadd.f32 0.0, %v143
    %v145 = vpop.f32.mrb[0].mxu0
    %146 = vdwg.mxu0
    %v148 = vcombine.high %v144, %v144
    %vm150 = vcmask 125952
    %v151 = vsel %vm150, %v144, 0.0
    %152 = vadd.xlane.f32.xlu0 %v151
    %v153 = vpop.xlane.xlu0 %152
    %v154 = vsel %vm150, %v148, 0.0
    %155 = vadd.xlane.f32.xlu0 %v154
    %v156 = vpop.xlane.xlu0 %155
    %v157 = vmul.f32 %v144, %v144
    %v158 = vmul.f32 %v148, %v148
    %v159 = vsel %vm150, %v157, 0.0
    %160 = vadd.xlane.f32.xlu0 %v159
    %v161 = vpop.xlane.xlu0 %160
    %v162 = vsel %vm150, %v158, 0.0
    %163 = vadd.xlane.f32.xlu0 %v162
    %v164 = vpop.xlane.xlu0 %163
    %vm165 = vcmask 1043456
    %v166 = vsel %vm165, %v153, 0.0
    %v167 = vsel %vm165, %v156, 0.0
    %v168 = vadd.f32 %v166, %v167
    %v169 = vsel %vm165, %v161, 0.0
    %v170 = vsel %vm165, %v164, 0.0
    %v171 = vadd.f32 %v169, %v170
    %v172 = vmul.f32 %v168, 0.03125
    %v173 = vmul.f32 %v171, 0.03125
    %v174 = vmul.f32 %v172, %v172
    %v175 = vsub.f32 %v173, %v174
    %v176 = vadd.f32 %v175, 1e-05
    %v177 = vrsqrt.pop %v176
    %v178 = vld [vmem:[%s2] sm:$0xf]
    %v179 = vmul.f32 %v177, %v178
    %v180 = vld [vmem:[%s3] sm:$0xf]
    %v181 = vmul.f32 %v172, %v179
    %v182 = vsub.f32 %v180, %v181
    %184 = vset.pattern.permute.xlu0 0
    %185 = vperm.xlu0 %184, %v179
    %v186 = vpop.permute.xlu0 %185
    %v188 = vmul.f32 %v144, %v186
    %v189 = vmul.f32 %v148, %v186
    %191 = vset.pattern.permute.xlu0 0
    %192 = vperm.xlu0 %191, %v182
    %v193 = vpop.permute.xlu0 %192
    %v195 = vadd.f32 %v188, %v193
    %v196 = vadd.f32 %v189, %v193
    %v197 = vpack.c.bf16 %v195, %v195
    %v198 = vpack.c.bf16 %v196, %v196
    %v199 = vld [vmem:[%s4] sm:$0xf]
    %v200 = vld [vmem:[%s4 + $0x4] sm:$0xf]
    %s201 = scalar_lea.vmem %s4, 8
    %v202 = vld [vmem:[%s201] sm:$0xf]
    %v203 = vld [vmem:[%s201 + $0x4] sm:$0xf]
    %v206 = vunpack.c.l.b16 %v197
    %v207 = vunpack.c.l.b16 %v198
    %v208 = vrot.slane %v206, 1
    %vm209 = vcmask 1041409
    %v210 = vsel %vm209, %v207, %v208
    %v211 = vpack.c.b16 %v210, %v210
    %v214 = vunpack.c.l.b16 %v202
    %v215 = vunpack.c.l.b16 %v203
    %v216 = vpack.c.b16 %v215, %v214
    %vm218 = vcmask 130048
    %v220 = vsel %vm218, %v211, 0
    %222 = vmatprep.subr.bf16.mxu0 0
    %223 = vmatpush1.bf16.msra.mxu0 %v216
    %224 = vmatprep.subr.bf16.mxu0 0
    %225 = vmatpush1.bf16.msra.mxu0 0
    %226 = vmatprep.subr.bf16.mxu0 0
    %227 = vmatpush1.bf16.msra.mxu0 0
    %228 = vmatprep.subr.bf16.mxu0 0
    %229 = vmatpush1.bf16.msra.mxu0 0
    %230 = vmatprep.subr.bf16.mxu0 0
    %231 = vmatpush1.bf16.msra.mxu0 0
    %232 = vmatprep.subr.bf16.mxu0 0
    %233 = vmatpush1.bf16.msra.mxu0 0
    %234 = vmatprep.subr.bf16.mxu0 0
    %235 = vmatpush1.bf16.msra.mxu0 0
    %236 = vmatprep.subr.bf16.mxu0 0
    %237 = vmatpush1.bf16.msra.mxu0 0
    %238 = vmatprep.subr.bf16.mxu0 0
    %239 = vmatpush1.bf16.msra.mxu0 0
    %240 = vmatprep.subr.bf16.mxu0 0
    %241 = vmatpush1.bf16.msra.mxu0 0
    %242 = vmatprep.subr.bf16.mxu0 0
    %243 = vmatpush1.bf16.msra.mxu0 0
    %244 = vmatprep.subr.bf16.mxu0 0
    %245 = vmatpush1.bf16.msra.mxu0 0
    %246 = vmatprep.subr.bf16.mxu0 0
    %247 = vmatpush1.bf16.msra.mxu0 0
    %248 = vmatprep.subr.bf16.mxu0 0
    %249 = vmatpush1.bf16.msra.mxu0 0
    %250 = vmatprep.subr.bf16.mxu0 0
    %251 = vmatpush1.bf16.msra.mxu0 0
    %252 = vmatprep.subr.bf16.mxu0 0
    %253 = vmatpush1.bf16.msra.mxu0 0
    %254 = vmatprep.mubr.bf16.mxu0 0
    %255 = vmatmul.mubr.bf16.gmra.mrb[0].mxu0 %v220
    %v256 = vpop.f32.mrb[0].mxu0
    %v257 = vadd.f32 0.0, %v256
    %v258 = vpop.f32.mrb[0].mxu0
    %v259 = vpop.f32.mrb[0].mxu0
    %v260 = vpop.f32.mrb[0].mxu0
    %261 = vdwg.mxu0
    %v262 = vrot.slane %v207, 7
    %v263 = vsel %vm209, %v262, %v206
    %v264 = vpack.c.b16 %v263, %v263
    %v267 = vunpack.c.l.b16 %v199
    %v268 = vunpack.c.l.b16 %v200
    %v269 = vpack.c.b16 %v268, %v267
    %v272 = vsel %vm218, %v264, 0
    %274 = vmatprep.subr.bf16.mxu0 0
    %275 = vmatpush1.bf16.msra.mxu0 %v269
    %276 = vmatprep.subr.bf16.mxu0 0
    %277 = vmatpush1.bf16.msra.mxu0 0
    %278 = vmatprep.subr.bf16.mxu0 0
    %279 = vmatpush1.bf16.msra.mxu0 0
    %280 = vmatprep.subr.bf16.mxu0 0
    %281 = vmatpush1.bf16.msra.mxu0 0
    %282 = vmatprep.subr.bf16.mxu0 0
    %283 = vmatpush1.bf16.msra.mxu0 0
    %284 = vmatprep.subr.bf16.mxu0 0
    %285 = vmatpush1.bf16.msra.mxu0 0
    %286 = vmatprep.subr.bf16.mxu0 0
    %287 = vmatpush1.bf16.msra.mxu0 0
    %288 = vmatprep.subr.bf16.mxu0 0
    %289 = vmatpush1.bf16.msra.mxu0 0
    %290 = vmatprep.subr.bf16.mxu0 0
    %291 = vmatpush1.bf16.msra.mxu0 0
    %292 = vmatprep.subr.bf16.mxu0 0
    %293 = vmatpush1.bf16.msra.mxu0 0
    %294 = vmatprep.subr.bf16.mxu0 0
    %295 = vmatpush1.bf16.msra.mxu0 0
    %296 = vmatprep.subr.bf16.mxu0 0
    %297 = vmatpush1.bf16.msra.mxu0 0
    %298 = vmatprep.subr.bf16.mxu0 0
    %299 = vmatpush1.bf16.msra.mxu0 0
    %300 = vmatprep.subr.bf16.mxu0 0
    %301 = vmatpush1.bf16.msra.mxu0 0
    %302 = vmatprep.subr.bf16.mxu0 0
    %303 = vmatpush1.bf16.msra.mxu0 0
    %304 = vmatprep.subr.bf16.mxu0 0
    %305 = vmatpush1.bf16.msra.mxu0 0
    %306 = vmatprep.mubr.bf16.mxu0 0
    %307 = vmatmul.mubr.bf16.gmra.mrb[0].mxu0 %v272
    %v308 = vpop.f32.mrb[0].mxu0
    %v309 = vadd.f32 %v257, %v308
    %v310 = vpop.f32.mrb[0].mxu0
    %v311 = vpop.f32.mrb[0].mxu0
    %v312 = vpop.f32.mrb[0].mxu0
    %313 = vdwg.mxu0
    %s314 = scalar_lea.vmem %s4, 16
    %v315 = vld [vmem:[%s314] sm:$0xf]
    %v316 = vld [vmem:[%s314 + $0x4] sm:$0xf]
    %v317 = vrot.slane %v206, 2
    %v318 = vrot.slane %v207, 1
    %v319 = vsel %vm209, %v318, %v317
    %v320 = vpack.c.b16 %v319, %v319
    %v323 = vunpack.c.l.b16 %v315
    %v324 = vunpack.c.l.b16 %v316
    %v325 = vpack.c.b16 %v324, %v323
    %v328 = vsel %vm218, %v320, 0
    %330 = vmatprep.subr.bf16.mxu0 0
    %331 = vmatpush1.bf16.msra.mxu0 %v325
    %332 = vmatprep.subr.bf16.mxu0 0
    %333 = vmatpush1.bf16.msra.mxu0 0
    %334 = vmatprep.subr.bf16.mxu0 0
    %335 = vmatpush1.bf16.msra.mxu0 0
    %336 = vmatprep.subr.bf16.mxu0 0
    %337 = vmatpush1.bf16.msra.mxu0 0
    %338 = vmatprep.subr.bf16.mxu0 0
    %339 = vmatpush1.bf16.msra.mxu0 0
    %340 = vmatprep.subr.bf16.mxu0 0
    %341 = vmatpush1.bf16.msra.mxu0 0
    %342 = vmatprep.subr.bf16.mxu0 0
    %343 = vmatpush1.bf16.msra.mxu0 0
    %344 = vmatprep.subr.bf16.mxu0 0
    %345 = vmatpush1.bf16.msra.mxu0 0
    %346 = vmatprep.subr.bf16.mxu0 0
    %347 = vmatpush1.bf16.msra.mxu0 0
    %348 = vmatprep.subr.bf16.mxu0 0
    %349 = vmatpush1.bf16.msra.mxu0 0
    %350 = vmatprep.subr.bf16.mxu0 0
    %351 = vmatpush1.bf16.msra.mxu0 0
    %352 = vmatprep.subr.bf16.mxu0 0
    %353 = vmatpush1.bf16.msra.mxu0 0
    %354 = vmatprep.subr.bf16.mxu0 0
    %355 = vmatpush1.bf16.msra.mxu0 0
    %356 = vmatprep.subr.bf16.mxu0 0
    %357 = vmatpush1.bf16.msra.mxu0 0
    %358 = vmatprep.subr.bf16.mxu0 0
    %359 = vmatpush1.bf16.msra.mxu0 0
    %360 = vmatprep.subr.bf16.mxu0 0
    %361 = vmatpush1.bf16.msra.mxu0 0
    %362 = vmatprep.mubr.bf16.mxu0 0
    %363 = vmatmul.mubr.bf16.gmra.mrb[0].mxu0 %v328
    %v364 = vpop.f32.mrb[0].mxu0
    %v365 = vadd.f32 0.0, %v364
    %v366 = vpop.f32.mrb[0].mxu0
    %v367 = vpop.f32.mrb[0].mxu0
    %v368 = vpop.f32.mrb[0].mxu0
    %369 = vdwg.mxu0
    %v370 = vadd.f32 %v309, %v365
    %s371 = scalar_lea.vmem %s4, 24
    %v372 = vld [vmem:[%s371] sm:$0xf]
    %v373 = vld [vmem:[%s371 + $0x4] sm:$0xf]
    %v374 = vrot.slane %v206, 3
    %v375 = vrot.slane %v207, 2
    %v376 = vsel %vm209, %v375, %v374
    %v377 = vpack.c.b16 %v376, %v376
    %v380 = vunpack.c.l.b16 %v372
    %v381 = vunpack.c.l.b16 %v373
    %v382 = vpack.c.b16 %v381, %v380
    %v385 = vsel %vm218, %v377, 0
    %387 = vmatprep.subr.bf16.mxu0 0
    %388 = vmatpush1.bf16.msra.mxu0 %v382
    %389 = vmatprep.subr.bf16.mxu0 0
    %390 = vmatpush1.bf16.msra.mxu0 0
    %391 = vmatprep.subr.bf16.mxu0 0
    %392 = vmatpush1.bf16.msra.mxu0 0
    %393 = vmatprep.subr.bf16.mxu0 0
    %394 = vmatpush1.bf16.msra.mxu0 0
    %395 = vmatprep.subr.bf16.mxu0 0
    %396 = vmatpush1.bf16.msra.mxu0 0
    %397 = vmatprep.subr.bf16.mxu0 0
    %398 = vmatpush1.bf16.msra.mxu0 0
    %399 = vmatprep.subr.bf16.mxu0 0
    %400 = vmatpush1.bf16.msra.mxu0 0
    %401 = vmatprep.subr.bf16.mxu0 0
    %402 = vmatpush1.bf16.msra.mxu0 0
    %403 = vmatprep.subr.bf16.mxu0 0
    %404 = vmatpush1.bf16.msra.mxu0 0
    %405 = vmatprep.subr.bf16.mxu0 0
    %406 = vmatpush1.bf16.msra.mxu0 0
    %407 = vmatprep.subr.bf16.mxu0 0
    %408 = vmatpush1.bf16.msra.mxu0 0
    %409 = vmatprep.subr.bf16.mxu0 0
    %410 = vmatpush1.bf16.msra.mxu0 0
    %411 = vmatprep.subr.bf16.mxu0 0
    %412 = vmatpush1.bf16.msra.mxu0 0
    %413 = vmatprep.subr.bf16.mxu0 0
    %414 = vmatpush1.bf16.msra.mxu0 0
    %415 = vmatprep.subr.bf16.mxu0 0
    %416 = vmatpush1.bf16.msra.mxu0 0
    %417 = vmatprep.subr.bf16.mxu0 0
    %418 = vmatpush1.bf16.msra.mxu0 0
    %419 = vmatprep.mubr.bf16.mxu0 0
    %420 = vmatmul.mubr.bf16.gmra.mrb[0].mxu0 %v385
    %v421 = vpop.f32.mrb[0].mxu0
    %v422 = vadd.f32 0.0, %v421
    %v423 = vpop.f32.mrb[0].mxu0
    %v424 = vpop.f32.mrb[0].mxu0
    %v425 = vpop.f32.mrb[0].mxu0
    %426 = vdwg.mxu0
    %v427 = vadd.f32 %v370, %v422
    %v428 = vld [vmem:[#allocation2] sm:$0x3]
    %v429 = vadd.f32 %v428, %v427
    %430 = vst [vmem:[#allocation2] sm:$0x3] %v429
    // Predicated region
    $region30: #{tpu_custom_call.1} parent=1 // pred_check
      _
    $region31: #{tpu_custom_call.1} parent=1 // pred_check_branch
      %432 = sbr.rel (0) target = $region33
    $region32: #{tpu_custom_call.1} parent=1 // pred_region
      %s434 = ssub.s32 32, 32
      %435 = vsyncadd [#allocation3], %s434
      %s437 = sshll.u32 [#allocation2], 4
      %s438 = int_to_ptr.vmem [resolvable:$true] %s437
      %440 = dma.vmem_to_hbm [thread:$0]  %s438, 32, %s6, [#allocation3]
    $region33: #{tpu_custom_call.1} parent=1 // pred_fallthru
      _
    // Predicated region
    $region34: #{tpu_custom_call.1} parent=1 // pred_check
      _
    $region35: #{tpu_custom_call.1} parent=1 // pred_check_branch
      %442 = sbr.rel (0) target = $region37
    $region36: #{tpu_custom_call.1} parent=1 // pred_region
      %443 = dma.done [#allocation3], 32
    $region37: #{tpu_custom_call.1} parent=1 // pred_fallthru
      _
    %444 = vsyncpa [#allocation3], 1

</llo_original>
